<compile_context>
chip_gen: v7x
topology: tpu7x:2x2x1
jax: 0.10.0
libtpu: 0.0.40
codegen_flags: <defaults>
</compile_context>

<pallas_src>
import math

import numpy as np
import jax
import jax.numpy as jnp
from jax.experimental import pallas as pl
from jax.experimental.pallas import tpu as pltpu


# ----------------------------------------------------------------------------
# init-time buffer construction (plain numpy "glue", mirrors ToS2Grid.__init__)
# ----------------------------------------------------------------------------

def _complete_lmax_res(lmax, res_beta, res_alpha):
    if res_beta is None:
        if lmax is not None:
            res_beta = 2 * (lmax + 1)
        elif res_alpha is not None:
            res_beta = 2 * ((res_alpha + 1) // 2)
        else:
            raise ValueError("All the entries are None")
    if res_alpha is None:
        if lmax is not None:
            res_alpha = max(2 * lmax + 1, res_beta - 1) if res_beta is not None else 2 * lmax + 1
        elif res_beta is not None:
            res_alpha = res_beta - 1
    if lmax is None:
        lmax = min(res_beta // 2 - 1, (res_alpha - 1) // 2)
    assert res_beta % 2 == 0
    assert lmax + 1 <= res_beta // 2
    return lmax, res_beta, res_alpha


def _expand_matrix(ls):
    lmax = max(ls)
    tot = sum(2 * l + 1 for l in ls)
    m = np.zeros((len(ls), 2 * lmax + 1, tot), dtype=np.float64)
    i = 0
    for j, l in enumerate(ls):
        m[j, lmax - l:lmax + l + 1, i:i + 2 * l + 1] = np.eye(2 * l + 1)
        i += 2 * l + 1
    return m


def _s2_grid(res_beta, res_alpha):
    betas = (np.arange(res_beta, dtype=np.float64) + 0.5) / res_beta * math.pi
    alphas = np.arange(res_alpha, dtype=np.float64) / res_alpha * 2 * math.pi
    return betas, alphas


def _spherical_harmonics_alpha(lmax, alphas):
    # matches e3nn o3.spherical_harmonics_alpha:
    # [sqrt2*sin(l a) .. sqrt2*sin(1 a), 1, sqrt2*cos(1 a) .. sqrt2*cos(l a)]
    a = alphas[:, None]
    m_sin = np.arange(lmax, 0, -1, dtype=np.float64)[None, :]
    m_cos = np.arange(1, lmax + 1, dtype=np.float64)[None, :]
    return np.concatenate(
        [math.sqrt(2) * np.sin(m_sin * a),
         np.ones((alphas.shape[0], 1)),
         math.sqrt(2) * np.cos(m_cos * a)],
        axis=1,
    )


def _legendre_flat(lmax, z, y):
    # Orthonormalized associated Legendre functions
    # Q_l^m = sqrt((2l+1)/(4pi) (l-m)!/(l+m)!) P_l^m(z), no Condon-Shortley.
    nb = z.shape[0]
    Q = np.zeros((lmax + 1, lmax + 1, nb), dtype=np.float64)
    Q[0, 0] = math.sqrt(1.0 / (4.0 * math.pi))
    for m in range(1, lmax + 1):
        Q[m, m] = math.sqrt((2 * m + 1) / (2.0 * m)) * y * Q[m - 1, m - 1]
    for m in range(0, lmax):
        Q[m + 1, m] = math.sqrt(2 * m + 3) * z * Q[m, m]
    for m in range(0, lmax + 1):
        for l in range(m + 2, lmax + 1):
            a = math.sqrt((4.0 * l * l - 1.0) / (l * l - m * m))
            c = math.sqrt(((l - 1) ** 2 - m * m) / (4.0 * (l - 1) ** 2 - 1.0))
            Q[l, m] = a * (z * Q[l - 1, m] - c * Q[l - 2, m])
    cols = []
    for l in range(lmax + 1):
        for ms in range(-l, l + 1):
            cols.append(Q[l, abs(ms)])
    return np.stack(cols, axis=1)  # (res_beta, (lmax+1)^2)


def _round_up(n, m):
    return m * ((n + m - 1) // m)


def make_to_s2grid_buffers(lmax=None, res=None, normalization="component"):
    """Builds the fused weight W[i, b*A+a] once at init (true shape, no padding)."""
    if isinstance(res, int) or res is None:
        lmax, res_beta, res_alpha = _complete_lmax_res(lmax, res, None)
    else:
        lmax, res_beta, res_alpha = _complete_lmax_res(lmax, *res)
    betas, alphas = _s2_grid(res_beta, res_alpha)
    shb_raw = _legendre_flat(lmax, np.cos(betas), np.abs(np.sin(betas)))  # (B, I)
    sha = _spherical_harmonics_alpha(lmax, alphas)                        # (A, 2lmax+1)

    if normalization == "component":
        n = math.sqrt(4 * math.pi) * np.array(
            [1.0 / math.sqrt(2 * l + 1) for l in range(lmax + 1)]) / math.sqrt(lmax + 1)
    elif normalization == "norm":
        n = math.sqrt(4 * math.pi) * np.ones(lmax + 1) / math.sqrt(lmax + 1)
    elif normalization == "integral":
        n = np.ones(lmax + 1)
    else:
        raise ValueError(normalization)

    m = _expand_matrix(list(range(lmax + 1)))
    shb = np.einsum("lmj,bj,lmi,l->mbi", m, shb_raw, m, n)   # (M, B, I)

    I = (lmax + 1) ** 2
    B, A = res_beta, res_alpha

    # Fuse both contractions: W[i, b*A + a] = sum_m shb[m, b, i] * sha[a, m]
    w = np.einsum("mbi,am->iba", shb, sha).reshape(I, B * A)  # (I, B*A), float64

    w_f32 = jnp.asarray(w, jnp.float32)
    return {
        "w": w_f32,                                   # (I, B*A) float32
        "w_bf16": w_f32.astype(jnp.bfloat16),         # pre-cast once at init
        "shb": jnp.asarray(shb, jnp.float32),         # (M, B, I)  (reference check)
        "sha": jnp.asarray(sha, jnp.float32),         # (A, M)     (reference check)
        "lmax": lmax,
        "res_beta": B,
        "res_alpha": A,
        "irreps_dim": I,
    }


# ----------------------------------------------------------------------------
# Pallas kernel: one lane-dense MXU matmul per (BA-tile, Z-tile) grid point
# ----------------------------------------------------------------------------

def _to_s2grid_kernel(x_ref, w_ref, o_ref):
    # x_ref: (tz, I), w_ref: (I, tba), o_ref: (tz, tba)
    o_ref[...] = jnp.dot(
        x_ref[...], w_ref[...], preferred_element_type=jnp.float32
    ).astype(o_ref.dtype)


def to_s2grid_forward(x, bufs, *, tile_z=256, tile_ba=1024,
                      compute_dtype=jnp.float32, out_dtype=jnp.float32):
    """x: (..., (lmax+1)^2) -> (..., res_beta, res_alpha).

    compute_dtype=jnp.bfloat16 is recommended on v6e/v7x (f32 accumulation is
    kept via preferred_element_type); out_dtype=jnp.bfloat16 halves output
    writeback when the consumer tolerates it.
    """
    B, A, I = bufs["res_beta"], bufs["res_alpha"], bufs["irreps_dim"]
    BA = B * A

    if compute_dtype == jnp.bfloat16:
        w = bufs["w_bf16"]
    elif compute_dtype == jnp.float32:
        w = bufs["w"]
    else:
        w = bufs["w"].astype(compute_dtype)
    assert w.shape == (I, BA)

    size = x.shape[:-1]
    assert x.shape[-1] == I, (x.shape, I)
    xf = x.reshape(-1, I).astype(compute_dtype)      # free reshape, cast only if needed
    Z = xf.shape[0]

    # Z tile: multiple of 8 (sublane); never pad a tiny batch up to 128+ rows.
    tz = min(_round_up(tile_z, 8), _round_up(Z, 8))
    # BA tile: full dim if it fits, else a multiple of 128 (lane-dense stores).
    tba = BA if BA <= tile_ba else max(128, 128 * (tile_ba // 128))
    n_z = pl.cdiv(Z, tz)
    n_ba = pl.cdiv(BA, tba)

    # Weight slab spec: BA is the OUTER grid axis so each W slab is DMA'd once
    # (tiny x is re-streamed).  When there is a single BA tile the block index
    # never changes -> single-buffer it (halves the largest VMEM resident).
    if n_ba == 1:
        w_spec = pl.BlockSpec((I, tba), lambda j, i: (0, j),
                              pipeline_mode=pl.Buffered(1))
        w_bufs = 1
    else:
        w_spec = pl.BlockSpec((I, tba), lambda j, i: (0, j))
        w_bufs = 2

    c_isz = np.dtype(compute_dtype).itemsize
    o_isz = np.dtype(out_dtype).itemsize

    # Explicit scoped-VMEM budget (blocks incl. internal tile padding, double
    # buffers, ~2x headroom); matters mostly on v5e's 16 MiB scoped default.
    needed = (2 * tz * _round_up(I, 128) * c_isz
              + w_bufs * _round_up(I, 8) * _round_up(tba, 128) * c_isz
              + 2 * tz * _round_up(tba, 128) * o_isz)
    vmem_limit = int(min(max(2 * needed, 32 << 20), 64 << 20))

    # True (un-padded) work; W bytes counted once (grid-invariant per BA slab).
    cost = pl.CostEstimate(
        flops=2 * Z * I * BA,
        transcendentals=0,
        bytes_accessed=Z * I * c_isz + I * BA * c_isz + Z * BA * o_isz,
    )

    out = pl.pallas_call(
        _to_s2grid_kernel,
        out_shape=jax.ShapeDtypeStruct((Z, BA), out_dtype),
        grid=(n_ba, n_z),                       # BA outer, Z inner
        in_specs=[
            pl.BlockSpec((tz, I), lambda j, i: (i, 0)),   # K block = full I: no pad
            w_spec,
        ],
        out_specs=pl.BlockSpec((tz, tba), lambda j, i: (i, j)),
        compiler_params=pltpu.CompilerParams(
            dimension_semantics=("parallel", "parallel"),
            vmem_limit_bytes=vmem_limit),
        cost_estimate=cost,
    )(xf, w)

    # Row-major split of the last axis + leading dims: free metadata reshape.
    return out.reshape(*size, B, A)


# ----------------------------------------------------------------------------

if __name__ == "__main__":
    key = jax.random.PRNGKey(0)
    k1, k2 = jax.random.split(key)

    # --- test 1: even res_alpha (PyTorch sha-matmul branch), single BA tile ---
    lmax = 4
    bufs = make_to_s2grid_buffers(lmax, (12, 12), normalization="component")
    B, A, I = bufs["res_beta"], bufs["res_alpha"], bufs["irreps_dim"]

    x = jax.random.normal(k1, (2, 8, I), dtype=jnp.float32)
    y = to_s2grid_forward(x, bufs)
    y = jax.block_until_ready(y)

    xf = x.reshape(-1, I)
    ref = jnp.einsum("mbi,zi->zbm", bufs["shb"], xf)
    ref = jnp.einsum("am,zbm->zba", bufs["sha"], ref).reshape(2, 8, B, A)

    assert y.shape == (2, 8, B, A), y.shape
    assert y.dtype == jnp.float32
    assert jnp.allclose(y, ref, atol=1e-4), float(jnp.max(jnp.abs(y - ref)))

    # --- test 2: odd res_alpha, multi-tile BA + partial Z tile paths ---
    bufs2 = make_to_s2grid_buffers(5, (12, 23), normalization="component")
    B2, A2, I2 = bufs2["res_beta"], bufs2["res_alpha"], bufs2["irreps_dim"]
    x2 = jax.random.normal(k2, (20, I2), dtype=jnp.float32)
    y2 = to_s2grid_forward(x2, bufs2, tile_z=16, tile_ba=128)
    y2 = jax.block_until_ready(y2)

    ref2 = jnp.einsum("mbi,zi->zbm", bufs2["shb"], x2)
    ref2 = jnp.einsum("am,zbm->zba", bufs2["sha"], ref2)
    assert y2.shape == (20, B2, A2), y2.shape
    assert jnp.allclose(y2, ref2, atol=2e-4), float(jnp.max(jnp.abs(y2 - ref2)))

    # --- test 3: bf16 compute path (pre-cast W), loose tolerance smoke check ---
    y3 = to_s2grid_forward(x, bufs, compute_dtype=jnp.bfloat16)
    y3 = jax.block_until_ready(y3)
    assert y3.shape == (2, 8, B, A)
    assert jnp.allclose(y3, ref, atol=5e-2, rtol=5e-2), \
        float(jnp.max(jnp.abs(y3 - ref)))

    print("KERNEL_OK")
</pallas_src>

<mosaic_0001>
module attributes {stable_mosaic.version = 11 : i64} {
  func.func @_to_s2grid_kernel(%arg0: i32, %arg1: i32, %arg2: memref<16x25xf32, #tpu.memory_space<vmem>>, %arg3: memref<25x144xf32, #tpu.memory_space<vmem>>, %arg4: memref<16x144xf32, #tpu.memory_space<vmem>>) attributes {dimension_semantics = [#tpu.dimension_semantics<parallel>, #tpu.dimension_semantics<parallel>], iteration_bounds = array<i64: 1, 1>, scalar_prefetch = 0 : i64, scratch_operands = 0 : i64, tpu.core_type = #tpu.core_type<tc>, window_params = [{transform_indices = @transform_0, window_bounds = array<i64: 16, 25>}, {pipeline_mode = #tpu.pipeline_mode<synchronous>, transform_indices = @transform_1, window_bounds = array<i64: 25, 144>}, {transform_indices = @transform_2, window_bounds = array<i64: 16, 144>}]} {
    %c0 = arith.constant 0 : index
    %c0_0 = arith.constant 0 : index
    %0 = vector.load %arg2[%c0, %c0_0] : memref<16x25xf32, #tpu.memory_space<vmem>>, vector<16x25xf32>
    %c0_1 = arith.constant 0 : index
    %c0_2 = arith.constant 0 : index
    %1 = vector.load %arg3[%c0_1, %c0_2] : memref<25x144xf32, #tpu.memory_space<vmem>>, vector<25x144xf32>
    %cst = arith.constant dense<0.000000e+00> : vector<16x144xf32>
    %2 = tpu.matmul %0, %1, %cst {dimension_numbers = #tpu.dot_dimension_numbers<[1], [0], [0], [1], [0, 0, 1, 1], [], []>} : vector<16x25xf32>, vector<25x144xf32>, vector<16x144xf32> -> vector<16x144xf32>
    %c0_3 = arith.constant 0 : index
    %c0_4 = arith.constant 0 : index
    %3 = vector.load %arg4[%c0_3, %c0_4] : memref<16x144xf32, #tpu.memory_space<vmem>>, vector<16x144xf32>
    tpu.vector_store %arg4[%c0_3, %c0_4], %2 {strides = array<i32>} : memref<16x144xf32, #tpu.memory_space<vmem>>, vector<16x144xf32>,
    return
  }
  func.func @transform_0(%arg0: i32, %arg1: i32) -> (i32, i32) {
    %c0_i32 = arith.constant 0 : i32
    %c0_i32_0 = arith.constant 0 : i32
    return %arg1, %c0_i32 : i32, i32
  }
  func.func @transform_1(%arg0: i32, %arg1: i32) -> (i32, i32) {
    %c0_i32 = arith.constant 0 : i32
    %c0_i32_0 = arith.constant 0 : i32
    return %c0_i32, %arg0 : i32, i32
  }
  func.func @transform_2(%arg0: i32, %arg1: i32) -> (i32, i32) {
    %c0_i32 = arith.constant 0 : i32
    return %arg1, %arg0 : i32, i32
  }
}

</mosaic_0001>

<llo_original>
// kernel: tpu_custom_call.1
$region0: #{tpu_custom_call.1}
  #allocation0 [shape = 'u32[]', space=smem, size = 0x4, offset = 0x4, fixed_abs, tag = 'smem constant byte address 0x4 - core index']
  #allocation1 [shape = 'u32[144,128]{1,0:T(1,128)}', space=vmem, size = 0x12000, scoped, tag = 'internal scratch']
  %s0 = inlined_call_operand.hbm [shape: f32[16,25], index: 0, kind: input, shape index: {}]
  %s1 = inlined_call_operand.hbm [shape: f32[25,144], index: 1, kind: input, shape index: {}]
  %s2 = inlined_call_operand.hbm [shape: f32[16,144], index: 2, kind: output, shape index: {}]
  %s3 = sld [smem:[#allocation0]]
  $region26: #{tpu_custom_call.1} parent=0
    _
  %s5 = ssub.s32 1, %s3
  %s6 = scalar_select 0, %s5, %s3
  $region1: #{tpu_custom_call.1} parent=0
    #allocation2 [shape = 'u8[8192]{0}', space=vmem, size = 0x2000, scoped, tag = 'input window, operand 0, single buffered']
    #allocation3 [shape = 's32[1]{0}', space=sflag, size = 0x4, scoped, tag = 'scoped memory for tpu_custom_call.1']
    #allocation4 [shape = 's32[1]{0}', space=sflag, size = 0x4, scoped, tag = 'scoped memory for tpu_custom_call.1']
    #allocation5 [shape = 'u8[32768]{0}', space=vmem, size = 0x8000, scoped, tag = 'input window, operand 1, single buffered']
    #allocation6 [shape = 's32[1]{0}', space=sflag, size = 0x4, scoped, tag = 'scoped memory for tpu_custom_call.1']
    #allocation7 [shape = 'u8[16384]{0}', space=vmem, size = 0x4000, scoped, tag = 'output window, operand 0, single buffered']
    %7 = vsyncpa [#allocation3], 0
    %8 = vsyncpa [#allocation6], 0
    %9 = vsyncpa [#allocation4], 0
    // Predicated region
    $region2: #{tpu_custom_call.1} parent=1 // pred_check
      _
    $region3: #{tpu_custom_call.1} parent=1 // pred_check_branch
      %11 = sbr.rel (0) target = $region5
    $region4: #{tpu_custom_call.1} parent=1 // pred_region
      %s13 = ssub.s32 256, 256
      %14 = vsyncadd [#allocation3], %s13
      %s15 = sshll.u32 [#allocation2], 4
      %s16 = int_to_ptr.vmem [resolvable:$true] %s15
      %21 = dma.hbm_to_vmem [thread:$0]  %s0, 256, %s16, [#allocation3], 128, 128, 8
    $region5: #{tpu_custom_call.1} parent=1 // pred_fallthru
      _
    // Predicated region
    $region6: #{tpu_custom_call.1} parent=1 // pred_check
      _
    $region7: #{tpu_custom_call.1} parent=1 // pred_check_branch
      %23 = sbr.rel (0) target = $region9
    $region8: #{tpu_custom_call.1} parent=1 // pred_region
      %s25 = ssub.s32 1024, 1024
      %26 = vsyncadd [#allocation6], %s25
      %s27 = sshll.u32 [#allocation5], 4
      %s28 = int_to_ptr.vmem [resolvable:$true] %s27
      %33 = dma.hbm_to_vmem [thread:$0]  %s1, 1024, %s28, [#allocation6], 256, 256, 16
    $region9: #{tpu_custom_call.1} parent=1 // pred_fallthru
      _
    // Predicated region
    $region10: #{tpu_custom_call.1} parent=1 // pred_check
      _
    $region11: #{tpu_custom_call.1} parent=1 // pred_check_branch
      %35 = sbr.rel (0) target = $region13
    $region12: #{tpu_custom_call.1} parent=1 // pred_region
      %36 = dma.done [#allocation3], 256
    $region13: #{tpu_custom_call.1} parent=1 // pred_fallthru
      _
    // Predicated region
    $region14: #{tpu_custom_call.1} parent=1 // pred_check
      _
    $region15: #{tpu_custom_call.1} parent=1 // pred_check_branch
      %38 = sbr.rel (0) target = $region17
    $region16: #{tpu_custom_call.1} parent=1 // pred_region
      %39 = dma.done [#allocation6], 1024
    $region17: #{tpu_custom_call.1} parent=1 // pred_fallthru
      _
    %v40 = vld [vmem:[#allocation2] sm:$0xff]
    %v41 = vld [vmem:[#allocation2 + $0x8] sm:$0xff]
    %v42 = vld [vmem:[#allocation5] sm:$0xff]
    %v43 = vld [vmem:[#allocation5 + $0x8] sm:$0xff]
    %v44 = vld [vmem:[#allocation5 + $0x10] sm:$0xff]
    %v45 = vld [vmem:[#allocation5 + $0x18] sm:$0xff]
    %v46 = vld [vmem:[#allocation5 + $0x20] sm:$0xff]
    %v47 = vld [vmem:[#allocation5 + $0x28] sm:$0xff]
    %v48 = vld [vmem:[#allocation5 + $0x30] sm:$0x1]
    %v49 = vld [vmem:[#allocation5 + $0x38] sm:$0x1]
    %vm50 = vcmask 203776
    %v52 = vsel %vm50, %v40, 0
    %v55 = vsel %vm50, %v41, 0
    %vm57 = vcmask 1040384
    %v59 = vsel %vm57, %v48, 0
    %v62 = vsel %vm57, %v49, 0
    %64 = vmatprep.subr.mxu0 %v43
    %65 = vmatpush1.msra.mxu0 %v42
    %66 = vmatprep.subr.mxu0 %v45
    %67 = vmatpush1.msra.mxu0 %v44
    %68 = vmatprep.subr.mxu0 %v47
    %69 = vmatpush1.msra.mxu0 %v46
    %70 = vmatprep.subr.mxu0 %v62
    %71 = vmatpush1.msra.mxu0 %v59
    %72 = vmatprep.subr.mxu0 0.0
    %73 = vmatpush1.msra.mxu0 0.0
    %74 = vmatprep.subr.mxu0 0.0
    %75 = vmatpush1.msra.mxu0 0.0
    %76 = vmatprep.subr.mxu0 0.0
    %77 = vmatpush1.msra.mxu0 0.0
    %78 = vmatprep.subr.mxu0 0.0
    %79 = vmatpush1.msra.mxu0 0.0
    %80 = vmatprep.subr.mxu0 0.0
    %81 = vmatpush1.msra.mxu0 0.0
    %82 = vmatprep.subr.mxu0 0.0
    %83 = vmatpush1.msra.mxu0 0.0
    %84 = vmatprep.subr.mxu0 0.0
    %85 = vmatpush1.msra.mxu0 0.0
    %86 = vmatprep.subr.mxu0 0.0
    %87 = vmatpush1.msra.mxu0 0.0
    %88 = vmatprep.subr.mxu0 0.0
    %89 = vmatpush1.msra.mxu0 0.0
    %90 = vmatprep.subr.mxu0 0.0
    %91 = vmatpush1.msra.mxu0 0.0
    %92 = vmatprep.subr.mxu0 0.0
    %93 = vmatpush1.msra.mxu0 0.0
    %94 = vmatprep.subr.mxu0 0.0
    %95 = vmatpush1.msra.mxu0 0.0
    %96 = vmatprep.subr.mxu0 0.0
    %97 = vmatpush1.msra.mxu0 0.0
    %98 = vmatprep.subr.mxu0 0.0
    %99 = vmatpush1.msra.mxu0 0.0
    %100 = vmatprep.subr.mxu0 0.0
    %101 = vmatpush1.msra.mxu0 0.0
    %102 = vmatprep.subr.mxu0 0.0
    %103 = vmatpush1.msra.mxu0 0.0
    %104 = vmatprep.subr.mxu0 0.0
    %105 = vmatpush1.msra.mxu0 0.0
    %106 = vmatprep.subr.mxu0 0.0
    %107 = vmatpush1.msra.mxu0 0.0
    %108 = vmatprep.subr.mxu0 0.0
    %109 = vmatpush1.msra.mxu0 0.0
    %110 = vmatprep.subr.mxu0 0.0
    %111 = vmatpush1.msra.mxu0 0.0
    %112 = vmatprep.subr.mxu0 0.0
    %113 = vmatpush1.msra.mxu0 0.0
    %114 = vmatprep.subr.mxu0 0.0
    %115 = vmatpush1.msra.mxu0 0.0
    %116 = vmatprep.subr.mxu0 0.0
    %117 = vmatpush1.msra.mxu0 0.0
    %118 = vmatprep.subr.mxu0 0.0
    %119 = vmatpush1.msra.mxu0 0.0
    %120 = vmatprep.subr.mxu0 0.0
    %121 = vmatpush1.msra.mxu0 0.0
    %122 = vmatprep.subr.mxu0 0.0
    %123 = vmatpush1.msra.mxu0 0.0
    %124 = vmatprep.subr.mxu0 0.0
    %125 = vmatpush1.msra.mxu0 0.0
    %126 = vmatprep.subr.mxu0 0.0
    %127 = vmatpush1.msra.mxu0 0.0
    %128 = vmatprep.mubr.f32.mxu0 0.0
    %129 = vmatmul.mubr.f32.gmra.mrb[0].mxu0 %v52
    %v130 = vpop.f32.mrb[0].mxu0
    %v131 = vadd.f32 0.0, %v130
    %v132 = vpop.f32.mrb[0].mxu0
    %v133 = vadd.f32 0.0, %v132
    %134 = vmatprep.mubr.f32.mxu0 0.0
    %135 = vmatmul.mubr.f32.gmra.mrb[0].mxu0 %v55
    %v136 = vpop.f32.mrb[0].mxu0
    %v137 = vadd.f32 0.0, %v136
    %v138 = vpop.f32.mrb[0].mxu0
    %v139 = vadd.f32 0.0, %v138
    %140 = vdwg.mxu0
    %141 = vst [vmem:[#allocation7] sm:$0xff] %v131
    %vm142 = vcmask 130048
    %143 = vst.msk [vmem:[#allocation7 + $0x8] sm:$0xff] %vm142, %v133
    %144 = vst [vmem:[#allocation7 + $0x10] sm:$0xff] %v137
    %145 = vst.msk [vmem:[#allocation7 + $0x18] sm:$0xff] %vm142, %v139
    // Predicated region
    $region18: #{tpu_custom_call.1} parent=1 // pred_check
      _
    $region19: #{tpu_custom_call.1} parent=1 // pred_check_branch
      %147 = sbr.rel (0) target = $region21
    $region20: #{tpu_custom_call.1} parent=1 // pred_region
      %s149 = ssub.s32 512, 512
      %150 = vsyncadd [#allocation4], %s149
      %s151 = sshll.u32 [#allocation7], 4
      %s152 = int_to_ptr.vmem [resolvable:$true] %s151
      %157 = dma.vmem_to_hbm [thread:$0]  %s152, 512, %s2, [#allocation4], 256, 256, 16
    $region21: #{tpu_custom_call.1} parent=1 // pred_fallthru
      _
    // Predicated region
    $region22: #{tpu_custom_call.1} parent=1 // pred_check
      _
    $region23: #{tpu_custom_call.1} parent=1 // pred_check_branch
      %159 = sbr.rel (0) target = $region25
    $region24: #{tpu_custom_call.1} parent=1 // pred_region
      %160 = dma.done [#allocation4], 512
    $region25: #{tpu_custom_call.1} parent=1 // pred_fallthru
      _
    %161 = vsyncpa [#allocation3], 1
    %162 = vsyncpa [#allocation6], 1
    %163 = vsyncpa [#allocation4], 1

</llo_original>
